<compile_context>
chip_gen: v7x
topology: tpu7x:2x2x1
jax: 0.10.0
libtpu: 0.0.40
codegen_flags: <defaults>
</compile_context>

<pallas_src>
import functools

import jax
import jax.numpy as jnp
from jax.experimental import pallas as pl
from jax.experimental.pallas import tpu as pltpu

EPS = 1e-5
LANE = 128


def _round_up(x, m):
    return (x + m - 1) // m * m


def _choose_m_tile(m, k_pad, budget_bytes=4 << 20):
    """Largest 128-multiple M tile (<= 1024) whose bf16 patch block stays under
    `budget_bytes`; double-buffered it stays far below the scoped-VMEM default
    on v5e/v6e/v7x.  The caller pads M up to a multiple of the returned tile,
    so the tile never has to shrink just to divide M."""
    m128 = _round_up(m, LANE)
    budget_cols = (budget_bytes // (k_pad * 2)) // LANE * LANE
    cap = min(1024, m128, budget_cols)
    return max(LANE, cap)


def _im2col_km(x, k, stride, pad, k_pad, m_pad):
    """x: (N, C, D, H, W) -> patches (N, Kpad, Mpad) in bf16.

    K ordered (c, kd, kh, kw) (matches Conv3d weight.reshape(Cout, -1));
    M = Do*Ho*Wo flattened row-major.  Padding regions are zero.
    """
    N, C, D, H, W = x.shape
    xp = jnp.pad(x, ((0, 0), (0, 0), (pad, pad), (pad, pad), (pad, pad)))
    Do = (D + 2 * pad - k) // stride + 1
    Ho = (H + 2 * pad - k) // stride + 1
    Wo = (W + 2 * pad - k) // stride + 1
    M = Do * Ho * Wo
    cols = []
    for kd in range(k):
        for kh in range(k):
            for kw in range(k):
                sl = xp[:, :,
                        kd:kd + (Do - 1) * stride + 1:stride,
                        kh:kh + (Ho - 1) * stride + 1:stride,
                        kw:kw + (Wo - 1) * stride + 1:stride]
                cols.append(sl.reshape(N, C, M))
    p = jnp.stack(cols, axis=2).reshape(N, C * k * k * k, M)
    p = p.astype(jnp.bfloat16)
    K = C * k * k * k
    p = jnp.pad(p, ((0, 0), (0, k_pad - K), (0, m_pad - M)))
    return p


def _fused_conv_relu_inorm_kernel(p_ref, w_ref, b_ref, o_ref,
                                  sum_ref, ssq_ref, *, tm, m_true, m_pad):
    """One grid step = one (sample, M-tile).

    p_ref:   (1, Kpad, tm)   bf16 patch tile (streams through the pipeline)
    w_ref:   (Cout, Kpad)    bf16 weights (fetched once, constant block index)
    b_ref:   (Cout, 1)       f32 bias
    o_ref:   (1, Cout, Mpad) f32, VMEM-resident across the M-tile axis
    sum_ref, ssq_ref: (Cout, 1) f32 scratch for the instance-norm statistics
                      (unused in the single-tile fast path)
    """
    t = pl.program_id(1)
    single_tile = (tm == m_pad)   # static Python decision

    if not single_tile:
        @pl.when(t == 0)
        def _():
            sum_ref[...] = jnp.zeros_like(sum_ref)
            ssq_ref[...] = jnp.zeros_like(ssq_ref)

    # Conv as MXU matmul with f32 accumulation, then bias + ReLU (all f32).
    acc = jnp.dot(w_ref[...], p_ref[0],
                  preferred_element_type=jnp.float32)          # (Cout, tm)
    acc = jnp.maximum(acc + b_ref[...], 0.0)

    # Single-pass statistics; mask padded M columns (they hold ReLU(bias)).
    if m_true != m_pad:
        col = t * tm + jax.lax.broadcasted_iota(jnp.int32, acc.shape, 1)
        acc_v = jnp.where(col < m_true, acc, 0.0)
    else:
        acc_v = acc

    inv_m = 1.0 / float(m_true)

    if single_tile:
        # Statistics are complete in-register: normalize directly and store the
        # slab exactly once (no resident-slab readback pass).
        s = jnp.sum(acc_v, axis=1, keepdims=True)
        ssq = jnp.sum(acc_v * acc_v, axis=1, keepdims=True)
        mean = s * inv_m                                        # (Cout, 1)
        var = jnp.maximum(ssq * inv_m - mean * mean, 0.0)
        inv_std = jax.lax.rsqrt(var + EPS)
        o_ref[0] = ((acc - mean) * inv_std).astype(o_ref.dtype)
    else:
        sum_ref[...] += jnp.sum(acc_v, axis=1, keepdims=True)
        ssq_ref[...] += jnp.sum(acc_v * acc_v, axis=1, keepdims=True)

        # Stash the un-normalized tile in the VMEM-resident output block.
        start = pl.multiple_of(t * tm, tm)
        o_ref[0, :, pl.ds(start, tm)] = acc

        # Finalize: normalize the whole per-sample slab once stats are complete.
        @pl.when(t == pl.num_programs(1) - 1)
        def _():
            mean = sum_ref[...] * inv_m                         # (Cout, 1)
            var = jnp.maximum(ssq_ref[...] * inv_m - mean * mean, 0.0)
            inv_std = jax.lax.rsqrt(var + EPS)
            o_ref[0] = ((o_ref[0] - mean) * inv_std).astype(o_ref.dtype)


def _fused_stage(patches, w_mat, bias, m_true, tm):
    """patches: (N, Kpad, Mpad) bf16; w_mat: (Cout, Kpad) bf16; bias: (Cout, 1).

    Returns (N, Cout, Mpad) f32 = Conv + bias + ReLU + InstanceNorm."""
    N, k_pad, m_pad = patches.shape
    c_out = w_mat.shape[0]
    n_tiles = m_pad // tm

    kernel = functools.partial(_fused_conv_relu_inorm_kernel,
                               tm=tm, m_true=m_true, m_pad=m_pad)

    cost = pl.CostEstimate(
        flops=2 * N * c_out * k_pad * m_pad + 6 * N * c_out * m_pad,
        transcendentals=N * c_out,
        bytes_accessed=(N * k_pad * m_pad * 2      # bf16 patches
                        + c_out * k_pad * 2        # bf16 weights
                        + c_out * 4                # f32 bias
                        + N * c_out * m_pad * 4),  # f32 output
    )

    return pl.pallas_call(
        kernel,
        out_shape=jax.ShapeDtypeStruct((N, c_out, m_pad), jnp.float32),
        grid_spec=pltpu.PrefetchScalarGridSpec(
            num_scalar_prefetch=0,
            grid=(N, n_tiles),
            in_specs=[
                pl.BlockSpec((1, k_pad, tm), lambda n, t: (n, 0, t)),
                pl.BlockSpec((c_out, k_pad), lambda n, t: (0, 0)),
                pl.BlockSpec((c_out, 1), lambda n, t: (0, 0)),
            ],
            out_specs=pl.BlockSpec((1, c_out, m_pad), lambda n, t: (n, 0, 0)),
            scratch_shapes=[pltpu.VMEM((c_out, 1), jnp.float32),
                            pltpu.VMEM((c_out, 1), jnp.float32)],
        ),
        compiler_params=pltpu.CompilerParams(
            dimension_semantics=("parallel", "arbitrary")),
        cost_estimate=cost,
    )(patches, w_mat, bias)


def _stage(x, w, b, k, stride, pad):
    """One Conv3d + ReLU + InstanceNorm3d stage.  x: (N, C, D, H, W) NCDHW."""
    N, C, D, H, W = x.shape
    c_out = w.shape[0]
    Do = (D + 2 * pad - k) // stride + 1
    Ho = (H + 2 * pad - k) // stride + 1
    Wo = (W + 2 * pad - k) // stride + 1
    M = Do * Ho * Wo
    K = C * k * k * k
    k_pad = _round_up(K, LANE)
    tm = _choose_m_tile(M, k_pad)
    m_pad = _round_up(M, tm)          # M padded to a multiple of the tile

    patches = _im2col_km(x, k, stride, pad, k_pad, m_pad)       # (N, Kpad, Mpad) bf16
    w_mat = jnp.pad(w.reshape(c_out, K), ((0, 0), (0, k_pad - K))
                    ).astype(jnp.bfloat16)                       # (Cout, Kpad)
    bias = b.reshape(c_out, 1).astype(jnp.float32)

    y = _fused_stage(patches, w_mat, bias, M, tm)                # (N, Cout, Mpad) f32
    # (N, Cout, M) == flattened NCDHW -> no transpose needed, just reshape.
    y = y[:, :, :M].reshape(N, c_out, Do, Ho, Wo)
    return y


def conv_block_down(x, params, kernel_size, padding):
    """Forward pass of ConvBlockDown.  x: (N, Cin, D, H, W) -> (N, Cout, D/2, H/2, W/2)."""
    k = kernel_size
    # stage 1: Conv3d(stride=2) + ReLU + InstanceNorm3d (fused Pallas kernel)
    y1 = _stage(x, params["w1"], params["b1"], k, stride=2, pad=padding)
    # stage 2: Conv3d(stride=1) + ReLU + InstanceNorm3d (fused Pallas kernel)
    y2 = _stage(y1, params["w2"], params["b2"], k, stride=1, pad=padding)
    return y2


# ----------------------- pure-JAX reference (for checking) -------------------
def _conv3d_ref(x, w, b, stride, pad):
    out = jax.lax.conv_general_dilated(
        x, w, window_strides=(stride,) * 3, padding=[(pad, pad)] * 3,
        dimension_numbers=("NCDHW", "OIDHW", "NCDHW"))
    return out + b.reshape(1, -1, 1, 1, 1)


def _instance_norm_ref(x):
    mean = x.mean(axis=(2, 3, 4), keepdims=True)
    var = ((x - mean) ** 2).mean(axis=(2, 3, 4), keepdims=True)
    return (x - mean) * jax.lax.rsqrt(var + EPS)


def conv_block_down_ref(x, params, k, pad):
    y = _conv3d_ref(x, params["w1"], params["b1"], 2, pad)
    y = _instance_norm_ref(jnp.maximum(y, 0.0))
    y = _conv3d_ref(y, params["w2"], params["b2"], 1, pad)
    y = _instance_norm_ref(jnp.maximum(y, 0.0))
    return y


# ---------------------------------- main -------------------------------------
if __name__ == "__main__":
    in_channels, out_channels = 4, 8
    kernel_size, padding = 3, 1
    N, D, H, W = 2, 8, 8, 8

    key = jax.random.PRNGKey(0)
    kw1, kb1, kw2, kb2, kx = jax.random.split(key, 5)

    fan1 = in_channels * kernel_size ** 3
    fan2 = out_channels * kernel_size ** 3
    bnd1 = 1.0 / (fan1 ** 0.5)
    bnd2 = 1.0 / (fan2 ** 0.5)
    params = {
        "w1": jax.random.uniform(kw1, (out_channels, in_channels,
                                       kernel_size, kernel_size, kernel_size),
                                 jnp.float32, -bnd1, bnd1),
        "b1": jax.random.uniform(kb1, (out_channels,), jnp.float32, -bnd1, bnd1),
        "w2": jax.random.uniform(kw2, (out_channels, out_channels,
                                       kernel_size, kernel_size, kernel_size),
                                 jnp.float32, -bnd2, bnd2),
        "b2": jax.random.uniform(kb2, (out_channels,), jnp.float32, -bnd2, bnd2),
    }

    x = jax.random.normal(kx, (N, in_channels, D, H, W), jnp.float32)

    fwd = jax.jit(functools.partial(conv_block_down,
                                    kernel_size=kernel_size, padding=padding))
    out = fwd(x, params)
    jax.block_until_ready(out)

    ref = conv_block_down_ref(x, params, kernel_size, padding)
    jax.block_until_ready(ref)

    assert out.shape == (N, out_channels, D // 2, H // 2, W // 2), out.shape
    # bf16 MXU inputs (f32 accumulation) -> slightly looser tolerance than pure f32.
    max_err = float(jnp.max(jnp.abs(out - ref)))
    assert jnp.allclose(out, ref, atol=3e-2, rtol=3e-2), max_err

    print("KERNEL_OK")
</pallas_src>

<mosaic_0001>
module attributes {stable_mosaic.version = 11 : i64} {
  func.func @_fused_conv_relu_inorm_kernel(%arg0: i32, %arg1: i32, %arg2: memref<1x128x128xbf16, #tpu.memory_space<vmem>>, %arg3: memref<8x128xbf16, #tpu.memory_space<vmem>>, %arg4: memref<8x1xf32, #tpu.memory_space<vmem>>, %arg5: memref<1x8x128xf32, #tpu.memory_space<vmem>>, %arg6: memref<8x1xf32, #tpu.memory_space<vmem>>, %arg7: memref<8x1xf32, #tpu.memory_space<vmem>>) attributes {dimension_semantics = [#tpu.dimension_semantics<parallel>, #tpu.dimension_semantics<arbitrary>], iteration_bounds = array<i64: 2, 1>, scalar_prefetch = 0 : i64, scratch_operands = 2 : i64, tpu.core_type = #tpu.core_type<tc>, window_params = [{transform_indices = @transform_0, window_bounds = array<i64: 1, 128, 128>}, {pipeline_mode = #tpu.pipeline_mode<synchronous>, transform_indices = @transform_1, window_bounds = array<i64: 8, 128>}, {pipeline_mode = #tpu.pipeline_mode<synchronous>, transform_indices = @transform_2, window_bounds = array<i64: 8, 1>}, {transform_indices = @transform_3, window_bounds = array<i64: 1, 8, 128>}]} {
    %c0 = arith.constant 0 : index
    %c0_0 = arith.constant 0 : index
    %0 = vector.load %arg3[%c0, %c0_0] : memref<8x128xbf16, #tpu.memory_space<vmem>>, vector<8x128xbf16>
    %c0_1 = arith.constant 0 : index
    %c0_2 = arith.constant 0 : index
    %c0_3 = arith.constant 0 : index
    %1 = vector.load %arg2[%c0_1, %c0_2, %c0_3] : memref<1x128x128xbf16, #tpu.memory_space<vmem>>, vector<1x128x128xbf16>
    %2 = vector.shape_cast %1 : vector<1x128x128xbf16> to vector<128x128xbf16>
    %cst = arith.constant dense<0.000000e+00> : vector<8x128xf32>
    %3 = tpu.matmul %0, %2, %cst {dimension_numbers = #tpu.dot_dimension_numbers<[1], [0], [0], [1], [0, 0, 1, 1], [], []>} : vector<8x128xbf16>, vector<128x128xbf16>, vector<8x128xf32> -> vector<8x128xf32>
    %c0_4 = arith.constant 0 : index
    %c0_5 = arith.constant 0 : index
    %4 = vector.load %arg4[%c0_4, %c0_5] : memref<8x1xf32, #tpu.memory_space<vmem>>, vector<8x1xf32>
    %5 = vector.broadcast %4 : vector<8x1xf32> to vector<8x128xf32>
    %6 = arith.addf %3, %5 : vector<8x128xf32>
    %cst_6 = arith.constant 0.000000e+00 : f32
    %7 = vector.broadcast %cst_6 : f32 to vector<8x128xf32>
    %8 = arith.maximumf %6, %7 : vector<8x128xf32>
    %c128_i32 = arith.constant 128 : i32
    %9 = arith.muli %arg1, %c128_i32 : i32
    %10 = tpu.iota {dimensions = array<i32: 1>} : vector<8x128xi32>
    %11 = vector.broadcast %9 : i32 to vector<8x128xi32>
    %12 = arith.addi %11, %10 : vector<8x128xi32>
    %c64_i32 = arith.constant 64 : i32
    %13 = vector.broadcast %c64_i32 : i32 to vector<8x128xi32>
    %14 = arith.cmpi slt, %12, %13 : vector<8x128xi32>
    %cst_7 = arith.constant 0.000000e+00 : f32
    %15 = vector.broadcast %cst_7 : f32 to vector<8x128xf32>
    %16 = arith.select %14, %8, %15 : vector<8x128xi1>, vector<8x128xf32>
    %cst_8 = arith.constant dense<0.000000e+00> : vector<8xf32>
    %17 = vector.multi_reduction <add>, %16, %cst_8 [1] : vector<8x128xf32> to vector<8xf32>
    %18 = vector.shape_cast %17 : vector<8xf32> to vector<8x1xf32>
    %19 = arith.mulf %16, %16 : vector<8x128xf32>
    %cst_9 = arith.constant dense<0.000000e+00> : vector<8xf32>
    %20 = vector.multi_reduction <add>, %19, %cst_9 [1] : vector<8x128xf32> to vector<8xf32>
    %21 = vector.shape_cast %20 : vector<8xf32> to vector<8x1xf32>
    %cst_10 = arith.constant 1.562500e-02 : f32
    %22 = vector.broadcast %cst_10 : f32 to vector<8x1xf32>
    %23 = arith.mulf %18, %22 : vector<8x1xf32>
    %cst_11 = arith.constant 1.562500e-02 : f32
    %24 = vector.broadcast %cst_11 : f32 to vector<8x1xf32>
    %25 = arith.mulf %21, %24 : vector<8x1xf32>
    %26 = arith.mulf %23, %23 : vector<8x1xf32>
    %27 = arith.subf %25, %26 : vector<8x1xf32>
    %cst_12 = arith.constant 0.000000e+00 : f32
    %28 = vector.broadcast %cst_12 : f32 to vector<8x1xf32>
    %29 = arith.maximumf %27, %28 : vector<8x1xf32>
    %cst_13 = arith.constant 9.99999974E-6 : f32
    %30 = vector.broadcast %cst_13 : f32 to vector<8x1xf32>
    %31 = arith.addf %29, %30 : vector<8x1xf32>
    %32 = math.rsqrt %31 : vector<8x1xf32>
    %33 = vector.broadcast %23 : vector<8x1xf32> to vector<8x128xf32>
    %34 = arith.subf %8, %33 : vector<8x128xf32>
    %35 = vector.broadcast %32 : vector<8x1xf32> to vector<8x128xf32>
    %36 = arith.mulf %34, %35 : vector<8x128xf32>
    %c0_14 = arith.constant 0 : index
    %c0_15 = arith.constant 0 : index
    %c0_16 = arith.constant 0 : index
    %37 = vector.load %arg5[%c0_14, %c0_15, %c0_16] : memref<1x8x128xf32, #tpu.memory_space<vmem>>, vector<1x8x128xf32>
    %38 = vector.shape_cast %37 : vector<1x8x128xf32> to vector<8x128xf32>
    %39 = vector.shape_cast %36 : vector<8x128xf32> to vector<1x8x128xf32>
    tpu.vector_store %arg5[%c0_14, %c0_15, %c0_16], %39 {strides = array<i32>} : memref<1x8x128xf32, #tpu.memory_space<vmem>>, vector<1x8x128xf32>,
    return
  }
  func.func @transform_0(%arg0: i32, %arg1: i32) -> (i32, i32, i32) {
    %c0_i32 = arith.constant 0 : i32
    %c0_i32_0 = arith.constant 0 : i32
    return %arg0, %c0_i32, %arg1 : i32, i32, i32
  }
  func.func @transform_1(%arg0: i32, %arg1: i32) -> (i32, i32) {
    %c0_i32 = arith.constant 0 : i32
    %c0_i32_0 = arith.constant 0 : i32
    %c0_i32_1 = arith.constant 0 : i32
    return %c0_i32, %c0_i32_0 : i32, i32
  }
  func.func @transform_2(%arg0: i32, %arg1: i32) -> (i32, i32) {
    %c0_i32 = arith.constant 0 : i32
    %c0_i32_0 = arith.constant 0 : i32
    %c0_i32_1 = arith.constant 0 : i32
    return %c0_i32, %c0_i32_0 : i32, i32
  }
  func.func @transform_3(%arg0: i32, %arg1: i32) -> (i32, i32, i32) {
    %c0_i32 = arith.constant 0 : i32
    %c0_i32_0 = arith.constant 0 : i32
    %c0_i32_1 = arith.constant 0 : i32
    return %arg0, %c0_i32, %c0_i32_0 : i32, i32, i32
  }
}

module attributes {stable_mosaic.version = 11 : i64} {
  func.func @_fused_conv_relu_inorm_kernel(%arg0: i32, %arg1: i32, %arg2: memref<1x256x128xbf16, #tpu.memory_space<vmem>>, %arg3: memref<8x256xbf16, #tpu.memory_space<vmem>>, %arg4: memref<8x1xf32, #tpu.memory_space<vmem>>, %arg5: memref<1x8x128xf32, #tpu.memory_space<vmem>>, %arg6: memref<8x1xf32, #tpu.memory_space<vmem>>, %arg7: memref<8x1xf32, #tpu.memory_space<vmem>>) attributes {dimension_semantics = [#tpu.dimension_semantics<parallel>, #tpu.dimension_semantics<arbitrary>], iteration_bounds = array<i64: 2, 1>, scalar_prefetch = 0 : i64, scratch_operands = 2 : i64, tpu.core_type = #tpu.core_type<tc>, window_params = [{transform_indices = @transform_0, window_bounds = array<i64: 1, 256, 128>}, {pipeline_mode = #tpu.pipeline_mode<synchronous>, transform_indices = @transform_1, window_bounds = array<i64: 8, 256>}, {pipeline_mode = #tpu.pipeline_mode<synchronous>, transform_indices = @transform_2, window_bounds = array<i64: 8, 1>}, {transform_indices = @transform_3, window_bounds = array<i64: 1, 8, 128>}]} {
    %c0 = arith.constant 0 : index
    %c0_0 = arith.constant 0 : index
    %0 = vector.load %arg3[%c0, %c0_0] : memref<8x256xbf16, #tpu.memory_space<vmem>>, vector<8x256xbf16>
    %c0_1 = arith.constant 0 : index
    %c0_2 = arith.constant 0 : index
    %c0_3 = arith.constant 0 : index
    %1 = vector.load %arg2[%c0_1, %c0_2, %c0_3] : memref<1x256x128xbf16, #tpu.memory_space<vmem>>, vector<1x256x128xbf16>
    %2 = vector.shape_cast %1 : vector<1x256x128xbf16> to vector<256x128xbf16>
    %cst = arith.constant dense<0.000000e+00> : vector<8x128xf32>
    %3 = tpu.matmul %0, %2, %cst {dimension_numbers = #tpu.dot_dimension_numbers<[1], [0], [0], [1], [0, 0, 1, 1], [], []>} : vector<8x256xbf16>, vector<256x128xbf16>, vector<8x128xf32> -> vector<8x128xf32>
    %c0_4 = arith.constant 0 : index
    %c0_5 = arith.constant 0 : index
    %4 = vector.load %arg4[%c0_4, %c0_5] : memref<8x1xf32, #tpu.memory_space<vmem>>, vector<8x1xf32>
    %5 = vector.broadcast %4 : vector<8x1xf32> to vector<8x128xf32>
    %6 = arith.addf %3, %5 : vector<8x128xf32>
    %cst_6 = arith.constant 0.000000e+00 : f32
    %7 = vector.broadcast %cst_6 : f32 to vector<8x128xf32>
    %8 = arith.maximumf %6, %7 : vector<8x128xf32>
    %c128_i32 = arith.constant 128 : i32
    %9 = arith.muli %arg1, %c128_i32 : i32
    %10 = tpu.iota {dimensions = array<i32: 1>} : vector<8x128xi32>
    %11 = vector.broadcast %9 : i32 to vector<8x128xi32>
    %12 = arith.addi %11, %10 : vector<8x128xi32>
    %c64_i32 = arith.constant 64 : i32
    %13 = vector.broadcast %c64_i32 : i32 to vector<8x128xi32>
    %14 = arith.cmpi slt, %12, %13 : vector<8x128xi32>
    %cst_7 = arith.constant 0.000000e+00 : f32
    %15 = vector.broadcast %cst_7 : f32 to vector<8x128xf32>
    %16 = arith.select %14, %8, %15 : vector<8x128xi1>, vector<8x128xf32>
    %cst_8 = arith.constant dense<0.000000e+00> : vector<8xf32>
    %17 = vector.multi_reduction <add>, %16, %cst_8 [1] : vector<8x128xf32> to vector<8xf32>
    %18 = vector.shape_cast %17 : vector<8xf32> to vector<8x1xf32>
    %19 = arith.mulf %16, %16 : vector<8x128xf32>
    %cst_9 = arith.constant dense<0.000000e+00> : vector<8xf32>
    %20 = vector.multi_reduction <add>, %19, %cst_9 [1] : vector<8x128xf32> to vector<8xf32>
    %21 = vector.shape_cast %20 : vector<8xf32> to vector<8x1xf32>
    %cst_10 = arith.constant 1.562500e-02 : f32
    %22 = vector.broadcast %cst_10 : f32 to vector<8x1xf32>
    %23 = arith.mulf %18, %22 : vector<8x1xf32>
    %cst_11 = arith.constant 1.562500e-02 : f32
    %24 = vector.broadcast %cst_11 : f32 to vector<8x1xf32>
    %25 = arith.mulf %21, %24 : vector<8x1xf32>
    %26 = arith.mulf %23, %23 : vector<8x1xf32>
    %27 = arith.subf %25, %26 : vector<8x1xf32>
    %cst_12 = arith.constant 0.000000e+00 : f32
    %28 = vector.broadcast %cst_12 : f32 to vector<8x1xf32>
    %29 = arith.maximumf %27, %28 : vector<8x1xf32>
    %cst_13 = arith.constant 9.99999974E-6 : f32
    %30 = vector.broadcast %cst_13 : f32 to vector<8x1xf32>
    %31 = arith.addf %29, %30 : vector<8x1xf32>
    %32 = math.rsqrt %31 : vector<8x1xf32>
    %33 = vector.broadcast %23 : vector<8x1xf32> to vector<8x128xf32>
    %34 = arith.subf %8, %33 : vector<8x128xf32>
    %35 = vector.broadcast %32 : vector<8x1xf32> to vector<8x128xf32>
    %36 = arith.mulf %34, %35 : vector<8x128xf32>
    %c0_14 = arith.constant 0 : index
    %c0_15 = arith.constant 0 : index
    %c0_16 = arith.constant 0 : index
    %37 = vector.load %arg5[%c0_14, %c0_15, %c0_16] : memref<1x8x128xf32, #tpu.memory_space<vmem>>, vector<1x8x128xf32>
    %38 = vector.shape_cast %37 : vector<1x8x128xf32> to vector<8x128xf32>
    %39 = vector.shape_cast %36 : vector<8x128xf32> to vector<1x8x128xf32>
    tpu.vector_store %arg5[%c0_14, %c0_15, %c0_16], %39 {strides = array<i32>} : memref<1x8x128xf32, #tpu.memory_space<vmem>>, vector<1x8x128xf32>,
    return
  }
  func.func @transform_0(%arg0: i32, %arg1: i32) -> (i32, i32, i32) {
    %c0_i32 = arith.constant 0 : i32
    %c0_i32_0 = arith.constant 0 : i32
    return %arg0, %c0_i32, %arg1 : i32, i32, i32
  }
  func.func @transform_1(%arg0: i32, %arg1: i32) -> (i32, i32) {
    %c0_i32 = arith.constant 0 : i32
    %c0_i32_0 = arith.constant 0 : i32
    %c0_i32_1 = arith.constant 0 : i32
    return %c0_i32, %c0_i32_0 : i32, i32
  }
  func.func @transform_2(%arg0: i32, %arg1: i32) -> (i32, i32) {
    %c0_i32 = arith.constant 0 : i32
    %c0_i32_0 = arith.constant 0 : i32
    %c0_i32_1 = arith.constant 0 : i32
    return %c0_i32, %c0_i32_0 : i32, i32
  }
  func.func @transform_3(%arg0: i32, %arg1: i32) -> (i32, i32, i32) {
    %c0_i32 = arith.constant 0 : i32
    %c0_i32_0 = arith.constant 0 : i32
    %c0_i32_1 = arith.constant 0 : i32
    return %arg0, %c0_i32, %c0_i32_0 : i32, i32, i32
  }
}

</mosaic_0001>

<llo_original>
// kernel: conv_block_down.2
$region0: #{conv_block_down.2}
  #allocation0 [shape = 'u32[]', space=smem, size = 0x4, offset = 0x4, fixed_abs, tag = 'smem constant byte address 0x4 - core index']
  #allocation1 [shape = 'u32[144,128]{1,0:T(1,128)}', space=vmem, size = 0x12000, scoped, tag = 'internal scratch']
  #allocation2 [shape = 'f32[8,1]{1,0:T(8,128)}', space=vmem, size = 0x1000, scoped, tag = 'scratch operand']
  #allocation3 [shape = 'f32[8,1]{1,0:T(8,128)}', space=vmem, size = 0x1000, scoped, tag = 'scratch operand']
  %s0 = inlined_call_operand.vmem [shape: bf16[2,128,128], index: 0, kind: input, shape index: {}]
  %s1 = inlined_call_operand.vmem [shape: bf16[8,128], index: 1, kind: input, shape index: {}]
  %s2 = inlined_call_operand.vmem [shape: f32[8,1], index: 2, kind: input, shape index: {}]
  %s3 = inlined_call_operand.vmem [shape: f32[2,8,128], index: 3, kind: output, shape index: {}]
  %s4 = sld [smem:[#allocation0]]
  $region45: #{conv_block_down.2} parent=0
    _
  %s6 = ssub.s32 1, %s4
  %s7 = scalar_select 0, %s6, %s4
  loop: start=0, step=1, limit=4
  $region2: #{conv_block_down.2} parent=0 // loop_pre_header
    _
  $region3: #{conv_block_down.2} parent=0 // loop_header
    %s9 = sphi 0, %s13
    %p10 = scmp.ge.s32.totalorder %s9, 4
    %s16 = sphi 0, %s28
    %s17 = sphi 0, %s24
    %s18 = sphi 0, %s16
    %s19 = sphi 0, %s17
    %s20 = sphi 0, %s18
    %s21 = sphi 0, %s19
    %s33 = sphi 0, %s35
    %s36 = sphi 0, %s33
    %s37 = sphi 0, %s36
    %s53 = sphi 0, %s37
    %s57 = sphi 0, %s57
    %s59 = sphi 0, %s57
    %s60 = sphi 0, %s59
    %s74 = sphi 0, %s60
    %s78 = sphi 0, %s78
    %s80 = sphi 0, %s78
    %s81 = sphi 0, %s80
    %s95 = sphi 0, %s81
    %s101 = sphi 0, %s103
    %s104 = sphi 0, %s101
    %s105 = sphi 0, %s104
    %s121 = sphi 0, %s105
  $region4: #{conv_block_down.2} parent=0 // loop_header_branch
    %12 = sbr.rel (%p10) target = $region8
  $region5: #{conv_block_down.2} parent=0 // loop_body
    %s14 = ssub.s32 %s9, 1
    %s15 = ssub.s32 %s9, 2
    %s22 = sadd.s32 1, %s17
    %p23 = scmp.ge.s32.totalorder %s22, 1
    %s24 = scalar_select %p23, 0, %s22
    %s25 = sadd.s32 1, %s16
    %s26 = scalar_select %p23, %s25, %s16
    %p27 = scmp.ge.s32.totalorder %s26, 2
    %s28 = scalar_select %p27, 0, %s26
    %s29 = ssub.s32 %s16, %s28
    %s30 = ssub.s32 %s17, %s24
    %s31 = sor.u32 %s29, %s30
    %p32 = scmp.eq.s32.totalorder %s31, 0
    %s34 = sadd.s32 %s33, 1
    %s35 = scalar_select %p32, %s33, %s34
    %p38 = pneg %p32
    %p39 = scmp.eq.s32.totalorder %s9, 1
    %p40 = por %p38, %p39
    %p41 = scmp.ne.s32.totalorder %s33, %s36
    %p42 = scmp.eq.s32.totalorder %s9, 0
    %p43 = por %p41, %p42
    %p44 = scmp.ne.s32.totalorder %s33, %s36
    %p45 = scmp.eq.s32.totalorder %s14, 1
    %p46 = por %p44, %p45
    %p47 = scmp.ne.s32.totalorder %s36, %s37
    %p48 = scmp.eq.s32.totalorder %s14, 0
    %p49 = por %p47, %p48
    %p50 = scmp.ne.s32.totalorder %s36, %s37
    %p51 = scmp.eq.s32.totalorder %s15, 1
    %p52 = por %p50, %p51
    %p54 = scmp.ne.s32.totalorder %s37, %s53
    %p55 = scmp.eq.s32.totalorder %s15, 0
    %p56 = por %p54, %p55
    %s58 = sadd.s32 %s57, 1
    %p61 = scmp.eq.s32.totalorder %s9, 1
    %p62 = scmp.ne.s32.totalorder %s57, %s59
    %p63 = scmp.eq.s32.totalorder %s9, 0
    %p64 = por %p62, %p63
    %p65 = scmp.ne.s32.totalorder %s57, %s59
    %p66 = scmp.eq.s32.totalorder %s14, 1
    %p67 = por %p65, %p66
    %p68 = scmp.ne.s32.totalorder %s59, %s60
    %p69 = scmp.eq.s32.totalorder %s14, 0
    %p70 = por %p68, %p69
    %p71 = scmp.ne.s32.totalorder %s59, %s60
    %p72 = scmp.eq.s32.totalorder %s15, 1
    %p73 = por %p71, %p72
    %p75 = scmp.ne.s32.totalorder %s60, %s74
    %p76 = scmp.eq.s32.totalorder %s15, 0
    %p77 = por %p75, %p76
    %s79 = sadd.s32 %s78, 1
    %p82 = scmp.eq.s32.totalorder %s9, 1
    %p83 = scmp.ne.s32.totalorder %s78, %s80
    %p84 = scmp.eq.s32.totalorder %s9, 0
    %p85 = por %p83, %p84
    %p86 = scmp.ne.s32.totalorder %s78, %s80
    %p87 = scmp.eq.s32.totalorder %s14, 1
    %p88 = por %p86, %p87
    %p89 = scmp.ne.s32.totalorder %s80, %s81
    %p90 = scmp.eq.s32.totalorder %s14, 0
    %p91 = por %p89, %p90
    %p92 = scmp.ne.s32.totalorder %s80, %s81
    %p93 = scmp.eq.s32.totalorder %s15, 1
    %p94 = por %p92, %p93
    %p96 = scmp.ne.s32.totalorder %s81, %s95
    %p97 = scmp.eq.s32.totalorder %s15, 0
    %p98 = por %p96, %p97
    %s99 = ssub.s32 %s16, %s28
    %p100 = scmp.eq.s32.totalorder %s99, 0
    %s102 = sadd.s32 %s101, 1
    %s103 = scalar_select %p100, %s101, %s102
    %p106 = pneg %p100
    %p107 = scmp.eq.s32.totalorder %s9, 1
    %p108 = por %p106, %p107
    %p109 = scmp.ne.s32.totalorder %s101, %s104
    %p110 = scmp.eq.s32.totalorder %s9, 0
    %p111 = por %p109, %p110
    %p112 = scmp.ne.s32.totalorder %s101, %s104
    %p113 = scmp.eq.s32.totalorder %s14, 1
    %p114 = por %p112, %p113
    %p115 = scmp.ne.s32.totalorder %s104, %s105
    %p116 = scmp.eq.s32.totalorder %s14, 0
    %p117 = por %p115, %p116
    %p118 = scmp.ne.s32.totalorder %s104, %s105
    %p119 = scmp.eq.s32.totalorder %s15, 1
    %p120 = por %p118, %p119
    %p122 = scmp.ne.s32.totalorder %s105, %s121
    %p123 = scmp.eq.s32.totalorder %s15, 0
    %p124 = por %p122, %p123
    %p125 = scmp.le.s32.totalorder 1, %s9
    %p126 = scmp.lt.s32.totalorder %s9, 3
    %p127 = pnand %p125, %p126
    %p128 = pneg %p127
    // Predicated region
    $region9: #{conv_block_down.2} parent=5 // pred_check
      _
    $region10: #{conv_block_down.2} parent=5 // pred_check_branch
      %130 = sbr.rel (%p127) target = $region12
    $region11: #{conv_block_down.2} parent=5 // pred_region
      %s131 = ssub.s32 %s9, 1
      // Predicated region
      $region13: #{conv_block_down.2} parent=11 // pred_check
        %p132 = pneg %p70
      $region14: #{conv_block_down.2} parent=11 // pred_check_branch
        %134 = sbr.rel (%p132) target = $region16
      $region15: #{conv_block_down.2} parent=11 // pred_region
        _
      $region16: #{conv_block_down.2} parent=11 // pred_fallthru
        _
      // Predicated region
      $region17: #{conv_block_down.2} parent=11 // pred_check
        %p135 = pneg %p91
      $region18: #{conv_block_down.2} parent=11 // pred_check_branch
        %137 = sbr.rel (%p135) target = $region20
      $region19: #{conv_block_down.2} parent=11 // pred_region
        _
      $region20: #{conv_block_down.2} parent=11 // pred_fallthru
        _
    $region12: #{conv_block_down.2} parent=5 // pred_fallthru
      _
    %p138 = scmp.lt.s32.totalorder %s9, 2
    // Predicated region
    $region21: #{conv_block_down.2} parent=5 // pred_check
      %p139 = pneg %p138
    $region22: #{conv_block_down.2} parent=5 // pred_check_branch
      %141 = sbr.rel (%p139) target = $region24
    $region23: #{conv_block_down.2} parent=5 // pred_region
      // Predicated region
      $region25: #{conv_block_down.2} parent=23 // pred_check
        %p142 = pneg %p43
      $region26: #{conv_block_down.2} parent=23 // pred_check_branch
        %144 = sbr.rel (%p142) target = $region28
      $region27: #{conv_block_down.2} parent=23 // pred_region
        %p145 = scmp.lt.s32.totalorder %s16, 1
        %s146 = scalar_select %p145, %s16, 1
        %p147 = scmp.lt.s32.totalorder %s17, 0
        %s148 = scalar_select %p147, %s17, 0
        %s149 = smul.addr %s146, 16
        %s150 = sadd.s32 %s148, %s149
        %s151 = smul.addr %s150, 4
        %s152 = scalar_lea.vmem %s0, %s151
      $region28: #{conv_block_down.2} parent=23 // pred_fallthru
        _
    $region24: #{conv_block_down.2} parent=5 // pred_fallthru
      _
    %p153 = scmp.le.s32.totalorder 1, %s9
    %p154 = scmp.lt.s32.totalorder %s9, 3
    %p155 = pnand %p153, %p154
    %p156 = pneg %p155
    // Predicated region
    $region29: #{conv_block_down.2} parent=5 // pred_check
      _
    $region30: #{conv_block_down.2} parent=5 // pred_check_branch
      %158 = sbr.rel (%p155) target = $region32
    $region31: #{conv_block_down.2} parent=5 // pred_region
      %s159 = ssub.s32 %s9, 1
      %p160 = scmp.lt.s32.totalorder %s18, 1
      %s161 = scalar_select %p160, %s18, 1
      %p162 = scmp.lt.s32.totalorder %s19, 0
      %s163 = scalar_select %p162, %s19, 0
      %s164 = smul.addr %s161, 16
      %s165 = sadd.s32 %s163, %s164
      %s166 = smul.addr %s165, 4
      %s167 = scalar_lea.vmem %s0, %s166
      %p168 = pneg %p49
      %p169 = pneg %p46
      %p170 = pneg %p70
      %p171 = pneg %p67
      %p172 = pneg %p91
      %p173 = pneg %p88
      %p174 = pneg %p117
      %p175 = pneg %p114
      %p176 = scmp.lt.s32.totalorder %s18, 1
      %s177 = scalar_select %p176, %s18, 1
      %s178 = smul.addr %s177, 8
      %s179 = scalar_lea.vmem %s3, %s178
      %p180 = scmp.lt.s32.totalorder %s18, 1
      %s181 = scalar_select %p180, %s18, 1
      %p182 = scmp.lt.s32.totalorder %s19, 0
      %s183 = scalar_select %p182, %s19, 0
      %s184 = smul.addr %s181, 16
      %s185 = sadd.s32 %s183, %s184
      %s186 = smul.addr %s185, 4
      %s187 = scalar_lea.vmem %s0, %s186
      %p188 = scmp.lt.s32.totalorder %s18, 1
      %s189 = scalar_select %p188, %s18, 1
      %s190 = smul.addr %s189, 8
      %s191 = scalar_lea.vmem %s3, %s190
      %v193 = vld [vmem:[%s1] sm:$0xf]
      %v194 = vld [vmem:[%s187] sm:$0xf]
      %v195 = vld [vmem:[%s187 + $0x4] sm:$0xf]
      %v196 = vld [vmem:[%s187 + $0x8] sm:$0xf]
      %v197 = vld [vmem:[%s187 + $0xc] sm:$0xf]
      %v198 = vld [vmem:[%s187 + $0x10] sm:$0xf]
      %v199 = vld [vmem:[%s187 + $0x14] sm:$0xf]
      %v200 = vld [vmem:[%s187 + $0x18] sm:$0xf]
      %v201 = vld [vmem:[%s187 + $0x1c] sm:$0xf]
      %v202 = vld [vmem:[%s187 + $0x20] sm:$0xf]
      %v203 = vld [vmem:[%s187 + $0x24] sm:$0xf]
      %v204 = vld [vmem:[%s187 + $0x28] sm:$0xf]
      %v205 = vld [vmem:[%s187 + $0x2c] sm:$0xf]
      %v206 = vld [vmem:[%s187 + $0x30] sm:$0xf]
      %v207 = vld [vmem:[%s187 + $0x34] sm:$0xf]
      %v208 = vld [vmem:[%s187 + $0x38] sm:$0xf]
      %v209 = vld [vmem:[%s187 + $0x3c] sm:$0xf]
      %v210 = vld [vmem:[%s2] sm:$0xff]
      %212 = vset.pattern.permute.xlu0 0
      %213 = vperm.xlu0 %212, %v210
      %v214 = vpop.permute.xlu0 %213
      %v232 = vunpack.c.l.b16 %v194
      %v233 = vunpack.c.l.b16 %v195
      %v234 = vunpack.c.l.b16 %v196
      %v235 = vunpack.c.l.b16 %v197
      %v236 = vunpack.c.l.b16 %v198
      %v237 = vunpack.c.l.b16 %v199
      %v238 = vunpack.c.l.b16 %v200
      %v239 = vunpack.c.l.b16 %v201
      %v240 = vunpack.c.l.b16 %v202
      %v241 = vunpack.c.l.b16 %v203
      %v242 = vunpack.c.l.b16 %v204
      %v243 = vunpack.c.l.b16 %v205
      %v244 = vunpack.c.l.b16 %v206
      %v245 = vunpack.c.l.b16 %v207
      %v246 = vunpack.c.l.b16 %v208
      %v247 = vunpack.c.l.b16 %v209
      %v248 = vpack.c.b16 %v233, %v232
      %v249 = vpack.c.b16 %v235, %v234
      %v250 = vpack.c.b16 %v237, %v236
      %v251 = vpack.c.b16 %v239, %v238
      %v252 = vpack.c.b16 %v241, %v240
      %v253 = vpack.c.b16 %v243, %v242
      %v254 = vpack.c.b16 %v245, %v244
      %v255 = vpack.c.b16 %v247, %v246
      %264 = vmatprep.subr.bf16.mxu0 0
      %265 = vmatpush1.bf16.msra.mxu0 %v248
      %266 = vmatprep.subr.bf16.mxu0 0
      %267 = vmatpush1.bf16.msra.mxu0 %v249
      %268 = vmatprep.subr.bf16.mxu0 0
      %269 = vmatpush1.bf16.msra.mxu0 %v250
      %270 = vmatprep.subr.bf16.mxu0 0
      %271 = vmatpush1.bf16.msra.mxu0 %v251
      %272 = vmatprep.subr.bf16.mxu0 0
      %273 = vmatpush1.bf16.msra.mxu0 %v252
      %274 = vmatprep.subr.bf16.mxu0 0
      %275 = vmatpush1.bf16.msra.mxu0 %v253
      %276 = vmatprep.subr.bf16.mxu0 0
      %277 = vmatpush1.bf16.msra.mxu0 %v254
      %278 = vmatprep.subr.bf16.mxu0 0
      %279 = vmatpush1.bf16.msra.mxu0 %v255
      %280 = vmatprep.subr.bf16.mxu0 0
      %281 = vmatpush1.bf16.msra.mxu0 0
      %282 = vmatprep.subr.bf16.mxu0 0
      %283 = vmatpush1.bf16.msra.mxu0 0
      %284 = vmatprep.subr.bf16.mxu0 0
      %285 = vmatpush1.bf16.msra.mxu0 0
      %286 = vmatprep.subr.bf16.mxu0 0
      %287 = vmatpush1.bf16.msra.mxu0 0
      %288 = vmatprep.subr.bf16.mxu0 0
      %289 = vmatpush1.bf16.msra.mxu0 0
      %290 = vmatprep.subr.bf16.mxu0 0
      %291 = vmatpush1.bf16.msra.mxu0 0
      %292 = vmatprep.subr.bf16.mxu0 0
      %293 = vmatpush1.bf16.msra.mxu0 0
      %294 = vmatprep.subr.bf16.mxu0 0
      %295 = vmatpush1.bf16.msra.mxu0 0
      %296 = vmatprep.mubr.bf16.mxu0 0
      %297 = vmatmul.mubr.bf16.gmra.mrb[0].mxu0 %v193
      %v298 = vpop.f32.mrb[0].mxu0
      %v299 = vadd.f32 %v214, %v298
      %v300 = vpop.f32.mrb[0].mxu0
      %v301 = vpop.f32.mrb[0].mxu0
      %v302 = vpop.f32.mrb[0].mxu0
      %303 = vdwg.mxu0
      %v304 = vmax.f32 %v299, 0.0
      %s305 = smul.u32 %s19, 128
      %v306 = vlaneseq
      %v307 = vand.u32 %v306, 127
      %v308 = vstv %s305
      %v309 = vadd.s32 %v308, %v307
      %vm310 = vcmp.lt.s32.totalorder %v309, 64
      %v311 = vsel %vm310, %v304, 0.0
      %312 = vadd.xlane.f32.xlu0 %v311
      %v313 = vpop.xlane.xlu0 %312
      %v314 = vmul.f32 %v311, %v311
      %315 = vadd.xlane.f32.xlu0 %v314
      %v316 = vpop.xlane.xlu0 %315
      %v317 = vmul.f32 %v313, 0.015625
      %v318 = vmul.f32 %v316, 0.015625
      %v319 = vmul.f32 %v317, %v317
      %v320 = vsub.f32 %v318, %v319
      %v321 = vmax.f32 %v320, 0.0
      %v322 = vadd.f32 %v321, 1e-05
      %v323 = vrsqrt.pop %v322
      %v324 = vsub.f32 %v304, %v317
      %v325 = vmul.f32 %v324, %v323
      %326 = vst [vmem:[%s191] sm:$0xff] %v325
      %p327 = scmp.lt.s32.totalorder %s18, 1
      %s328 = scalar_select %p327, %s18, 1
      %s329 = smul.addr %s328, 8
      %s330 = scalar_lea.vmem %s3, %s329
      // Predicated region
      $region33: #{conv_block_down.2} parent=31 // pred_check
        %p331 = pneg %p114
      $region34: #{conv_block_down.2} parent=31 // pred_check_branch
        %333 = sbr.rel (%p331) target = $region36
      $region35: #{conv_block_down.2} parent=31 // pred_region
        _
      $region36: #{conv_block_down.2} parent=31 // pred_fallthru
        _
    $region32: #{conv_block_down.2} parent=5 // pred_fallthru
      _
    %p334 = scmp.le.s32.totalorder 2, %s9
    // Predicated region
    $region37: #{conv_block_down.2} parent=5 // pred_check
      %p335 = pneg %p334
    $region38: #{conv_block_down.2} parent=5 // pred_check_branch
      %337 = sbr.rel (%p335) target = $region40
    $region39: #{conv_block_down.2} parent=5 // pred_region
      %s338 = ssub.s32 %s9, 2
      // Predicated region
      $region41: #{conv_block_down.2} parent=39 // pred_check
        %p339 = pneg %p120
      $region42: #{conv_block_down.2} parent=39 // pred_check_branch
        %341 = sbr.rel (%p339) target = $region44
      $region43: #{conv_block_down.2} parent=39 // pred_region
        %p342 = scmp.lt.s32.totalorder %s20, 1
        %s343 = scalar_select %p342, %s20, 1
        %s344 = smul.addr %s343, 8
        %s345 = scalar_lea.vmem %s3, %s344
      $region44: #{conv_block_down.2} parent=39 // pred_fallthru
        _
    $region40: #{conv_block_down.2} parent=5 // pred_fallthru
      _
  $region6: #{conv_block_down.2} parent=0 // loop_footer
    %s13 = sadd.s32 1, %s9
  $region7: #{conv_block_down.2} parent=0 // loop_footer_branch
    %8 = sbr.rel target = $region3
  $region8: #{conv_block_down.2} parent=0 // loop_exit
    _

// kernel: conv_block_down.3
$region0: #{conv_block_down.3}
  #allocation0 [shape = 'u32[]', space=smem, size = 0x4, offset = 0x4, fixed_abs, tag = 'smem constant byte address 0x4 - core index']
  #allocation1 [shape = 'u32[144,128]{1,0:T(1,128)}', space=vmem, size = 0x12000, scoped, tag = 'internal scratch']
  #allocation2 [shape = 'f32[8,1]{1,0:T(8,128)}', space=vmem, size = 0x1000, scoped, tag = 'scratch operand']
  #allocation3 [shape = 'f32[8,1]{1,0:T(8,128)}', space=vmem, size = 0x1000, scoped, tag = 'scratch operand']
  %s0 = inlined_call_operand.vmem [shape: bf16[2,256,128], index: 0, kind: input, shape index: {}]
  %s1 = inlined_call_operand.vmem [shape: bf16[8,256], index: 1, kind: input, shape index: {}]
  %s2 = inlined_call_operand.vmem [shape: f32[8,1], index: 2, kind: input, shape index: {}]
  %s3 = inlined_call_operand.vmem [shape: f32[2,8,128], index: 3, kind: output, shape index: {}]
  %s4 = sld [smem:[#allocation0]]
  $region45: #{conv_block_down.3} parent=0
    _
  %s6 = ssub.s32 1, %s4
  %s7 = scalar_select 0, %s6, %s4
  loop: start=0, step=1, limit=4
  $region2: #{conv_block_down.3} parent=0 // loop_pre_header
    _
  $region3: #{conv_block_down.3} parent=0 // loop_header
    %s9 = sphi 0, %s13
    %p10 = scmp.ge.s32.totalorder %s9, 4
    %s16 = sphi 0, %s28
    %s17 = sphi 0, %s24
    %s18 = sphi 0, %s16
    %s19 = sphi 0, %s17
    %s20 = sphi 0, %s18
    %s21 = sphi 0, %s19
    %s33 = sphi 0, %s35
    %s36 = sphi 0, %s33
    %s37 = sphi 0, %s36
    %s53 = sphi 0, %s37
    %s57 = sphi 0, %s57
    %s59 = sphi 0, %s57
    %s60 = sphi 0, %s59
    %s74 = sphi 0, %s60
    %s78 = sphi 0, %s78
    %s80 = sphi 0, %s78
    %s81 = sphi 0, %s80
    %s95 = sphi 0, %s81
    %s101 = sphi 0, %s103
    %s104 = sphi 0, %s101
    %s105 = sphi 0, %s104
    %s121 = sphi 0, %s105
  $region4: #{conv_block_down.3} parent=0 // loop_header_branch
    %12 = sbr.rel (%p10) target = $region8
  $region5: #{conv_block_down.3} parent=0 // loop_body
    %s14 = ssub.s32 %s9, 1
    %s15 = ssub.s32 %s9, 2
    %s22 = sadd.s32 1, %s17
    %p23 = scmp.ge.s32.totalorder %s22, 1
    %s24 = scalar_select %p23, 0, %s22
    %s25 = sadd.s32 1, %s16
    %s26 = scalar_select %p23, %s25, %s16
    %p27 = scmp.ge.s32.totalorder %s26, 2
    %s28 = scalar_select %p27, 0, %s26
    %s29 = ssub.s32 %s16, %s28
    %s30 = ssub.s32 %s17, %s24
    %s31 = sor.u32 %s29, %s30
    %p32 = scmp.eq.s32.totalorder %s31, 0
    %s34 = sadd.s32 %s33, 1
    %s35 = scalar_select %p32, %s33, %s34
    %p38 = pneg %p32
    %p39 = scmp.eq.s32.totalorder %s9, 1
    %p40 = por %p38, %p39
    %p41 = scmp.ne.s32.totalorder %s33, %s36
    %p42 = scmp.eq.s32.totalorder %s9, 0
    %p43 = por %p41, %p42
    %p44 = scmp.ne.s32.totalorder %s33, %s36
    %p45 = scmp.eq.s32.totalorder %s14, 1
    %p46 = por %p44, %p45
    %p47 = scmp.ne.s32.totalorder %s36, %s37
    %p48 = scmp.eq.s32.totalorder %s14, 0
    %p49 = por %p47, %p48
    %p50 = scmp.ne.s32.totalorder %s36, %s37
    %p51 = scmp.eq.s32.totalorder %s15, 1
    %p52 = por %p50, %p51
    %p54 = scmp.ne.s32.totalorder %s37, %s53
    %p55 = scmp.eq.s32.totalorder %s15, 0
    %p56 = por %p54, %p55
    %s58 = sadd.s32 %s57, 1
    %p61 = scmp.eq.s32.totalorder %s9, 1
    %p62 = scmp.ne.s32.totalorder %s57, %s59
    %p63 = scmp.eq.s32.totalorder %s9, 0
    %p64 = por %p62, %p63
    %p65 = scmp.ne.s32.totalorder %s57, %s59
    %p66 = scmp.eq.s32.totalorder %s14, 1
    %p67 = por %p65, %p66
    %p68 = scmp.ne.s32.totalorder %s59, %s60
    %p69 = scmp.eq.s32.totalorder %s14, 0
    %p70 = por %p68, %p69
    %p71 = scmp.ne.s32.totalorder %s59, %s60
    %p72 = scmp.eq.s32.totalorder %s15, 1
    %p73 = por %p71, %p72
    %p75 = scmp.ne.s32.totalorder %s60, %s74
    %p76 = scmp.eq.s32.totalorder %s15, 0
    %p77 = por %p75, %p76
    %s79 = sadd.s32 %s78, 1
    %p82 = scmp.eq.s32.totalorder %s9, 1
    %p83 = scmp.ne.s32.totalorder %s78, %s80
    %p84 = scmp.eq.s32.totalorder %s9, 0
    %p85 = por %p83, %p84
    %p86 = scmp.ne.s32.totalorder %s78, %s80
    %p87 = scmp.eq.s32.totalorder %s14, 1
    %p88 = por %p86, %p87
    %p89 = scmp.ne.s32.totalorder %s80, %s81
    %p90 = scmp.eq.s32.totalorder %s14, 0
    %p91 = por %p89, %p90
    %p92 = scmp.ne.s32.totalorder %s80, %s81
    %p93 = scmp.eq.s32.totalorder %s15, 1
    %p94 = por %p92, %p93
    %p96 = scmp.ne.s32.totalorder %s81, %s95
    %p97 = scmp.eq.s32.totalorder %s15, 0
    %p98 = por %p96, %p97
    %s99 = ssub.s32 %s16, %s28
    %p100 = scmp.eq.s32.totalorder %s99, 0
    %s102 = sadd.s32 %s101, 1
    %s103 = scalar_select %p100, %s101, %s102
    %p106 = pneg %p100
    %p107 = scmp.eq.s32.totalorder %s9, 1
    %p108 = por %p106, %p107
    %p109 = scmp.ne.s32.totalorder %s101, %s104
    %p110 = scmp.eq.s32.totalorder %s9, 0
    %p111 = por %p109, %p110
    %p112 = scmp.ne.s32.totalorder %s101, %s104
    %p113 = scmp.eq.s32.totalorder %s14, 1
    %p114 = por %p112, %p113
    %p115 = scmp.ne.s32.totalorder %s104, %s105
    %p116 = scmp.eq.s32.totalorder %s14, 0
    %p117 = por %p115, %p116
    %p118 = scmp.ne.s32.totalorder %s104, %s105
    %p119 = scmp.eq.s32.totalorder %s15, 1
    %p120 = por %p118, %p119
    %p122 = scmp.ne.s32.totalorder %s105, %s121
    %p123 = scmp.eq.s32.totalorder %s15, 0
    %p124 = por %p122, %p123
    %p125 = scmp.le.s32.totalorder 1, %s9
    %p126 = scmp.lt.s32.totalorder %s9, 3
    %p127 = pnand %p125, %p126
    %p128 = pneg %p127
    // Predicated region
    $region9: #{conv_block_down.3} parent=5 // pred_check
      _
    $region10: #{conv_block_down.3} parent=5 // pred_check_branch
      %130 = sbr.rel (%p127) target = $region12
    $region11: #{conv_block_down.3} parent=5 // pred_region
      %s131 = ssub.s32 %s9, 1
      // Predicated region
      $region13: #{conv_block_down.3} parent=11 // pred_check
        %p132 = pneg %p70
      $region14: #{conv_block_down.3} parent=11 // pred_check_branch
        %134 = sbr.rel (%p132) target = $region16
      $region15: #{conv_block_down.3} parent=11 // pred_region
        _
      $region16: #{conv_block_down.3} parent=11 // pred_fallthru
        _
      // Predicated region
      $region17: #{conv_block_down.3} parent=11 // pred_check
        %p135 = pneg %p91
      $region18: #{conv_block_down.3} parent=11 // pred_check_branch
        %137 = sbr.rel (%p135) target = $region20
      $region19: #{conv_block_down.3} parent=11 // pred_region
        _
      $region20: #{conv_block_down.3} parent=11 // pred_fallthru
        _
    $region12: #{conv_block_down.3} parent=5 // pred_fallthru
      _
    %p138 = scmp.lt.s32.totalorder %s9, 2
    // Predicated region
    $region21: #{conv_block_down.3} parent=5 // pred_check
      %p139 = pneg %p138
    $region22: #{conv_block_down.3} parent=5 // pred_check_branch
      %141 = sbr.rel (%p139) target = $region24
    $region23: #{conv_block_down.3} parent=5 // pred_region
      // Predicated region
      $region25: #{conv_block_down.3} parent=23 // pred_check
        %p142 = pneg %p43
      $region26: #{conv_block_down.3} parent=23 // pred_check_branch
        %144 = sbr.rel (%p142) target = $region28
      $region27: #{conv_block_down.3} parent=23 // pred_region
        %p145 = scmp.lt.s32.totalorder %s16, 1
        %s146 = scalar_select %p145, %s16, 1
        %p147 = scmp.lt.s32.totalorder %s17, 0
        %s148 = scalar_select %p147, %s17, 0
        %s149 = smul.addr %s146, 32
        %s150 = sadd.s32 %s148, %s149
        %s151 = smul.addr %s150, 4
        %s152 = scalar_lea.vmem %s0, %s151
      $region28: #{conv_block_down.3} parent=23 // pred_fallthru
        _
    $region24: #{conv_block_down.3} parent=5 // pred_fallthru
      _
    %p153 = scmp.le.s32.totalorder 1, %s9
    %p154 = scmp.lt.s32.totalorder %s9, 3
    %p155 = pnand %p153, %p154
    %p156 = pneg %p155
    // Predicated region
    $region29: #{conv_block_down.3} parent=5 // pred_check
      _
    $region30: #{conv_block_down.3} parent=5 // pred_check_branch
      %158 = sbr.rel (%p155) target = $region32
    $region31: #{conv_block_down.3} parent=5 // pred_region
      %s159 = ssub.s32 %s9, 1
      %p160 = scmp.lt.s32.totalorder %s18, 1
      %s161 = scalar_select %p160, %s18, 1
      %p162 = scmp.lt.s32.totalorder %s19, 0
      %s163 = scalar_select %p162, %s19, 0
      %s164 = smul.addr %s161, 32
      %s165 = sadd.s32 %s163, %s164
      %s166 = smul.addr %s165, 4
      %s167 = scalar_lea.vmem %s0, %s166
      %p168 = pneg %p49
      %p169 = pneg %p46
      %p170 = pneg %p70
      %p171 = pneg %p67
      %p172 = pneg %p91
      %p173 = pneg %p88
      %p174 = pneg %p117
      %p175 = pneg %p114
      %p176 = scmp.lt.s32.totalorder %s18, 1
      %s177 = scalar_select %p176, %s18, 1
      %s178 = smul.addr %s177, 8
      %s179 = scalar_lea.vmem %s3, %s178
      %p180 = scmp.lt.s32.totalorder %s18, 1
      %s181 = scalar_select %p180, %s18, 1
      %p182 = scmp.lt.s32.totalorder %s19, 0
      %s183 = scalar_select %p182, %s19, 0
      %s184 = smul.addr %s181, 32
      %s185 = sadd.s32 %s183, %s184
      %s186 = smul.addr %s185, 4
      %s187 = scalar_lea.vmem %s0, %s186
      %p188 = scmp.lt.s32.totalorder %s18, 1
      %s189 = scalar_select %p188, %s18, 1
      %s190 = smul.addr %s189, 8
      %s191 = scalar_lea.vmem %s3, %s190
      %v193 = vld [vmem:[%s1] sm:$0xff]
      %v194 = vld [vmem:[%s187] sm:$0xf]
      %v195 = vld [vmem:[%s187 + $0x4] sm:$0xf]
      %v196 = vld [vmem:[%s187 + $0x8] sm:$0xf]
      %v197 = vld [vmem:[%s187 + $0xc] sm:$0xf]
      %v198 = vld [vmem:[%s187 + $0x10] sm:$0xf]
      %v199 = vld [vmem:[%s187 + $0x14] sm:$0xf]
      %v200 = vld [vmem:[%s187 + $0x18] sm:$0xf]
      %v201 = vld [vmem:[%s187 + $0x1c] sm:$0xf]
      %v202 = vld [vmem:[%s187 + $0x20] sm:$0xf]
      %v203 = vld [vmem:[%s187 + $0x24] sm:$0xf]
      %v204 = vld [vmem:[%s187 + $0x28] sm:$0xf]
      %v205 = vld [vmem:[%s187 + $0x2c] sm:$0xf]
      %v206 = vld [vmem:[%s187 + $0x30] sm:$0xf]
      %v207 = vld [vmem:[%s187 + $0x34] sm:$0xf]
      %v208 = vld [vmem:[%s187 + $0x38] sm:$0xf]
      %v209 = vld [vmem:[%s187 + $0x3c] sm:$0xf]
      %v210 = vld [vmem:[%s187 + $0x40] sm:$0xf]
      %v211 = vld [vmem:[%s187 + $0x44] sm:$0xf]
      %v212 = vld [vmem:[%s187 + $0x48] sm:$0xf]
      %v213 = vld [vmem:[%s187 + $0x4c] sm:$0xf]
      %v214 = vld [vmem:[%s187 + $0x50] sm:$0xf]
      %v215 = vld [vmem:[%s187 + $0x54] sm:$0xf]
      %v216 = vld [vmem:[%s187 + $0x58] sm:$0xf]
      %v217 = vld [vmem:[%s187 + $0x5c] sm:$0xf]
      %v218 = vld [vmem:[%s187 + $0x60] sm:$0xf]
      %v219 = vld [vmem:[%s187 + $0x64] sm:$0xf]
      %v220 = vld [vmem:[%s187 + $0x68] sm:$0xf]
      %v221 = vld [vmem:[%s187 + $0x6c] sm:$0xf]
      %v222 = vld [vmem:[%s187 + $0x70] sm:$0xf]
      %v223 = vld [vmem:[%s187 + $0x74] sm:$0xf]
      %v224 = vld [vmem:[%s187 + $0x78] sm:$0xf]
      %v225 = vld [vmem:[%s187 + $0x7c] sm:$0xf]
      %v226 = vld [vmem:[%s2] sm:$0xff]
      %228 = vset.pattern.permute.xlu0 0
      %229 = vperm.xlu0 %228, %v226
      %v230 = vpop.permute.xlu0 %229
      %v233 = vunpack.c.l.b16 %v193
      %v234 = vunpack.c.h.b16 %v193
      %v235 = vpack.c.b16 %v233, %v233
      %v236 = vpack.c.b16 %v234, %v234
      %v271 = vunpack.c.l.b16 %v194
      %v272 = vunpack.c.l.b16 %v195
      %v273 = vunpack.c.l.b16 %v196
      %v274 = vunpack.c.l.b16 %v197
      %v275 = vunpack.c.l.b16 %v198
      %v276 = vunpack.c.l.b16 %v199
      %v277 = vunpack.c.l.b16 %v200
      %v278 = vunpack.c.l.b16 %v201
      %v279 = vunpack.c.l.b16 %v202
      %v280 = vunpack.c.l.b16 %v203
      %v281 = vunpack.c.l.b16 %v204
      %v282 = vunpack.c.l.b16 %v205
      %v283 = vunpack.c.l.b16 %v206
      %v284 = vunpack.c.l.b16 %v207
      %v285 = vunpack.c.l.b16 %v208
      %v286 = vunpack.c.l.b16 %v209
      %v287 = vunpack.c.l.b16 %v210
      %v288 = vunpack.c.l.b16 %v211
      %v289 = vunpack.c.l.b16 %v212
      %v290 = vunpack.c.l.b16 %v213
      %v291 = vunpack.c.l.b16 %v214
      %v292 = vunpack.c.l.b16 %v215
      %v293 = vunpack.c.l.b16 %v216
      %v294 = vunpack.c.l.b16 %v217
      %v295 = vunpack.c.l.b16 %v218
      %v296 = vunpack.c.l.b16 %v219
      %v297 = vunpack.c.l.b16 %v220
      %v298 = vunpack.c.l.b16 %v221
      %v299 = vunpack.c.l.b16 %v222
      %v300 = vunpack.c.l.b16 %v223
      %v301 = vunpack.c.l.b16 %v224
      %v302 = vunpack.c.l.b16 %v225
      %v303 = vpack.c.b16 %v272, %v271
      %v304 = vpack.c.b16 %v274, %v273
      %v305 = vpack.c.b16 %v276, %v275
      %v306 = vpack.c.b16 %v278, %v277
      %v307 = vpack.c.b16 %v280, %v279
      %v308 = vpack.c.b16 %v282, %v281
      %v309 = vpack.c.b16 %v284, %v283
      %v310 = vpack.c.b16 %v286, %v285
      %v311 = vpack.c.b16 %v288, %v287
      %v312 = vpack.c.b16 %v290, %v289
      %v313 = vpack.c.b16 %v292, %v291
      %v314 = vpack.c.b16 %v294, %v293
      %v315 = vpack.c.b16 %v296, %v295
      %v316 = vpack.c.b16 %v298, %v297
      %v317 = vpack.c.b16 %v300, %v299
      %v318 = vpack.c.b16 %v302, %v301
      %335 = vmatprep.subr.bf16.mxu0 0
      %336 = vmatpush1.bf16.msra.mxu0 %v303
      %337 = vmatprep.subr.bf16.mxu0 0
      %338 = vmatpush1.bf16.msra.mxu0 %v304
      %339 = vmatprep.subr.bf16.mxu0 0
      %340 = vmatpush1.bf16.msra.mxu0 %v305
      %341 = vmatprep.subr.bf16.mxu0 0
      %342 = vmatpush1.bf16.msra.mxu0 %v306
      %343 = vmatprep.subr.bf16.mxu0 0
      %344 = vmatpush1.bf16.msra.mxu0 %v307
      %345 = vmatprep.subr.bf16.mxu0 0
      %346 = vmatpush1.bf16.msra.mxu0 %v308
      %347 = vmatprep.subr.bf16.mxu0 0
      %348 = vmatpush1.bf16.msra.mxu0 %v309
      %349 = vmatprep.subr.bf16.mxu0 0
      %350 = vmatpush1.bf16.msra.mxu0 %v310
      %351 = vmatprep.subr.bf16.mxu0 0
      %352 = vmatpush1.bf16.msra.mxu0 %v311
      %353 = vmatprep.subr.bf16.mxu0 0
      %354 = vmatpush1.bf16.msra.mxu0 %v312
      %355 = vmatprep.subr.bf16.mxu0 0
      %356 = vmatpush1.bf16.msra.mxu0 %v313
      %357 = vmatprep.subr.bf16.mxu0 0
      %358 = vmatpush1.bf16.msra.mxu0 %v314
      %359 = vmatprep.subr.bf16.mxu0 0
      %360 = vmatpush1.bf16.msra.mxu0 %v315
      %361 = vmatprep.subr.bf16.mxu0 0
      %362 = vmatpush1.bf16.msra.mxu0 %v316
      %363 = vmatprep.subr.bf16.mxu0 0
      %364 = vmatpush1.bf16.msra.mxu0 %v317
      %365 = vmatprep.subr.bf16.mxu0 0
      %366 = vmatpush1.bf16.msra.mxu0 %v318
      %367 = vmatprep.mubr.bf16.mxu0 %v236
      %368 = vmatmul.mubr.bf16.gmra.mrb[0].mxu0 %v235
      %v369 = vpop.f32.mrb[0].mxu0
      %v370 = vadd.f32 %v230, %v369
      %v371 = vpop.f32.mrb[0].mxu0
      %v372 = vpop.f32.mrb[0].mxu0
      %v373 = vpop.f32.mrb[0].mxu0
      %374 = vdwg.mxu0
      %v375 = vmax.f32 %v370, 0.0
      %s376 = smul.u32 %s19, 128
      %v377 = vlaneseq
      %v378 = vand.u32 %v377, 127
      %v379 = vstv %s376
      %v380 = vadd.s32 %v379, %v378
      %vm381 = vcmp.lt.s32.totalorder %v380, 64
      %v382 = vsel %vm381, %v375, 0.0
      %383 = vadd.xlane.f32.xlu0 %v382
      %v384 = vpop.xlane.xlu0 %383
      %v385 = vmul.f32 %v382, %v382
      %386 = vadd.xlane.f32.xlu0 %v385
      %v387 = vpop.xlane.xlu0 %386
      %v388 = vmul.f32 %v384, 0.015625
      %v389 = vmul.f32 %v387, 0.015625
      %v390 = vmul.f32 %v388, %v388
      %v391 = vsub.f32 %v389, %v390
      %v392 = vmax.f32 %v391, 0.0
      %v393 = vadd.f32 %v392, 1e-05
      %v394 = vrsqrt.pop %v393
      %v395 = vsub.f32 %v375, %v388
      %v396 = vmul.f32 %v395, %v394
      %397 = vst [vmem:[%s191] sm:$0xff] %v396
      %p398 = scmp.lt.s32.totalorder %s18, 1
      %s399 = scalar_select %p398, %s18, 1
      %s400 = smul.addr %s399, 8
      %s401 = scalar_lea.vmem %s3, %s400
      // Predicated region
      $region33: #{conv_block_down.3} parent=31 // pred_check
        %p402 = pneg %p114
      $region34: #{conv_block_down.3} parent=31 // pred_check_branch
        %404 = sbr.rel (%p402) target = $region36
      $region35: #{conv_block_down.3} parent=31 // pred_region
        _
      $region36: #{conv_block_down.3} parent=31 // pred_fallthru
        _
    $region32: #{conv_block_down.3} parent=5 // pred_fallthru
      _
    %p405 = scmp.le.s32.totalorder 2, %s9
    // Predicated region
    $region37: #{conv_block_down.3} parent=5 // pred_check
      %p406 = pneg %p405
    $region38: #{conv_block_down.3} parent=5 // pred_check_branch
      %408 = sbr.rel (%p406) target = $region40
    $region39: #{conv_block_down.3} parent=5 // pred_region
      %s409 = ssub.s32 %s9, 2
      // Predicated region
      $region41: #{conv_block_down.3} parent=39 // pred_check
        %p410 = pneg %p120
      $region42: #{conv_block_down.3} parent=39 // pred_check_branch
        %412 = sbr.rel (%p410) target = $region44
      $region43: #{conv_block_down.3} parent=39 // pred_region
        %p413 = scmp.lt.s32.totalorder %s20, 1
        %s414 = scalar_select %p413, %s20, 1
        %s415 = smul.addr %s414, 8
        %s416 = scalar_lea.vmem %s3, %s415
      $region44: #{conv_block_down.3} parent=39 // pred_fallthru
        _
    $region40: #{conv_block_down.3} parent=5 // pred_fallthru
      _
  $region6: #{conv_block_down.3} parent=0 // loop_footer
    %s13 = sadd.s32 1, %s9
  $region7: #{conv_block_down.3} parent=0 // loop_footer_branch
    %8 = sbr.rel target = $region3
  $region8: #{conv_block_down.3} parent=0 // loop_exit
    _

</llo_original>
